<compile_context>
chip_gen: v7x
topology: tpu7x:2x2x1
jax: 0.10.0
libtpu: 0.0.40
codegen_flags: <defaults>
</compile_context>

<pallas_src>
import math
import functools

import jax
import jax.numpy as jnp
from jax.experimental import pallas as pl
from jax.experimental.pallas import tpu as pltpu


def _embeddings_kernel(ids_ref, table_ref, gamma_ref, beta_ref, out_ref, emb_ref,
                       *, eps, pack, token_tile, vocab_size, post_scale):
    """Grid = (token_tiles,) marked 'parallel'.

    ids_ref   : SMEM (N,) int32                     (scalar prefetch)
    table_ref : VMEM (V, D) resident block          (constant index_map -> DMA'd once)
    gamma_ref : VMEM (1, D) f32  (sqrt(D) scale folded in)
    beta_ref  : VMEM (1, D) f32  (sqrt(D) scale folded in)
    out_ref   : VMEM (token_tile // pack, pack * D) f32  (lane-dense output slab)
    emb_ref   : VMEM (token_tile, D) f32 scratch (gathered embedding rows)
    """
    i = pl.program_id(0)
    base = i * token_tile

    # ---- embedding lookup: true row gather (one dynamic-sliced VMEM copy per token) ----
    def gather_row(t, carry):
        idx = ids_ref[base + t]
        # Clamp keeps dynamic VMEM reads in bounds (PyTorch would raise on OOB ids).
        idx = jnp.minimum(jnp.maximum(idx, 0), vocab_size - 1)
        emb_ref[pl.ds(t, 1), :] = table_ref[pl.ds(idx, 1), :].astype(jnp.float32)
        return carry

    jax.lax.fori_loop(0, token_tile, gather_row, 0)

    # ---- LayerNorm (MaskedNorm eval path) -> ReLU -> scale, emitted lane-dense ----------
    rows = token_tile // pack
    gamma = gamma_ref[...]
    beta = beta_ref[...]
    chunks = []
    for k in range(pack):
        if pack == 1:
            e = emb_ref[...]
        else:
            # Tokens k, k+pack, k+2*pack, ... of this tile: the strided-sublane read feeds
            # lane group k of the packed output rows (row-major identical to (T, D)).
            e = emb_ref[pl.ds(k, rows, stride=pack), :]
        mean = jnp.mean(e, axis=-1, keepdims=True)
        c = e - mean
        var = jnp.mean(c * c, axis=-1, keepdims=True)
        act = jnp.maximum(c * jax.lax.rsqrt(var + eps) * gamma + beta, 0.0)
        if post_scale != 1.0:          # only used when scale_factor <= 0 (can't fold)
            act = act * post_scale
        chunks.append(act)
    out_ref[...] = chunks[0] if pack == 1 else jnp.concatenate(chunks, axis=-1)


def _padded_block_bytes(rows, cols, itemsize):
    """VMEM footprint of a 2-D block after (8, 128) tile padding."""
    return (-(-rows // 8) * 8) * (-(-cols // 128) * 128) * itemsize


def embeddings_forward(token_ids, table, gamma, beta, *, scale_factor=None,
                       eps=1e-5, token_tile=1024):
    """token_ids: (B, S) int; table: (V, D); gamma/beta: (D,). Returns (B, S, D) f32."""
    B, S = token_ids.shape
    V, D = table.shape
    N = B * S

    # Lane-dense packing factor for the output (only useful when D < 128).
    pack = 128 // D if (D < 128 and 128 % D == 0 and N % (128 // D) == 0) else 1

    # Token tile: as large as possible for step-overhead amortization, but capped at N//2
    # so the 'parallel' grid axis has >= 2 steps (v7x megacore: both TensorCores busy).
    req = min(int(token_tile), N)
    if N >= 16:
        req = min(req, max(N // 2, 1))

    def _pick(p):
        for t in range(req, 0, -1):
            if N % t:
                continue
            if t % p:
                continue
            if (t // p) % 8 == 0 or t == N:
                return t
        return None

    tile = _pick(pack)
    if tile is None:
        pack = 1
        tile = _pick(1) or N
    token_tile = tile

    ids_flat = token_ids.reshape(N).astype(jnp.int32)
    s = float(scale_factor) if scale_factor is not None else 1.0
    fold = s if s > 0.0 else 1.0          # relu(x) * s == relu(x * s) only for s > 0
    post_scale = 1.0 if s > 0.0 else s
    gamma2d = (gamma.astype(jnp.float32) * fold).reshape(1, D)
    beta2d = (beta.astype(jnp.float32) * fold).reshape(1, D)

    kernel = functools.partial(_embeddings_kernel, eps=float(eps), pack=pack,
                               token_tile=token_tile, vocab_size=V,
                               post_scale=post_scale)

    # VMEM budget with (8, 128) lane padding (D=32 blocks occupy 4x their raw lane bytes).
    table_bytes = _padded_block_bytes(V, D, table.dtype.itemsize)
    out_bytes = _padded_block_bytes(token_tile // pack, pack * D, 4)
    vec_bytes = _padded_block_bytes(1, D, 4)
    scratch_bytes = _padded_block_bytes(token_tile, D, 4)
    need = 2 * table_bytes + 2 * out_bytes + 4 * vec_bytes + scratch_bytes
    vmem_limit = int(min(max(2 * need, 4 << 20), 48 << 20))
    # TODO(synk): vocabularies whose lane-padded (V, D) table exceeds the scoped VMEM budget
    # (notably v7x's 64 MiB) need the SMEM-ids DMA row-gather variant (per-row
    # make_async_copy from an HBM-resident table) instead of the resident-table path.

    out_packed = pl.pallas_call(
        kernel,
        out_shape=jax.ShapeDtypeStruct((N // pack, pack * D), jnp.float32),
        grid_spec=pltpu.PrefetchScalarGridSpec(
            num_scalar_prefetch=1,                                  # token ids -> SMEM
            grid=(N // token_tile,),
            in_specs=[
                pl.BlockSpec((V, D), lambda i, ids: (0, 0)),        # resident table (1 DMA)
                pl.BlockSpec((1, D), lambda i, ids: (0, 0)),        # gamma * scale
                pl.BlockSpec((1, D), lambda i, ids: (0, 0)),        # beta  * scale
            ],
            out_specs=pl.BlockSpec((token_tile // pack, pack * D),
                                   lambda i, ids: (i, 0)),          # lane-dense output
            scratch_shapes=[pltpu.VMEM((token_tile, D), jnp.float32)],
        ),
        compiler_params=pltpu.CompilerParams(
            dimension_semantics=("parallel",),
            vmem_limit_bytes=vmem_limit),
    )(ids_flat, table, gamma2d, beta2d)

    # (N//pack, pack*D) has identical row-major bytes to (N, D).
    return out_packed.reshape(B, S, D)


def _reference(token_ids, table, gamma, beta, scale_factor, eps=1e-5):
    emb = table[token_ids]                                # (B, S, D)
    mean = jnp.mean(emb, axis=-1, keepdims=True)
    var = jnp.mean((emb - mean) ** 2, axis=-1, keepdims=True)
    normed = (emb - mean) * jax.lax.rsqrt(var + eps) * gamma + beta
    return jnp.maximum(normed, 0.0) * scale_factor


if __name__ == "__main__":
    # Module config: Embeddings(embedding_dim=32, num_heads=8, scale=True,
    #                           norm_type='layer', activation_type='relu',
    #                           vocab_size=128, padding_idx=1), eval mode.
    embedding_dim = 32
    vocab_size = 128
    padding_idx = 1
    scale_factor = math.sqrt(embedding_dim)

    B, S = 2, 32   # token ids x: (B, S) -> N = 64 tokens

    key = jax.random.PRNGKey(0)
    k_tab, k_ids = jax.random.split(key)

    # nn.Embedding weight ~ N(0,1), padding row zeroed (deterministic in-script init).
    table = jax.random.normal(k_tab, (vocab_size, embedding_dim), dtype=jnp.float32)
    table = table.at[padding_idx].set(0.0)

    # nn.LayerNorm defaults: weight=1, bias=0.
    gamma = jnp.ones((embedding_dim,), dtype=jnp.float32)
    beta = jnp.zeros((embedding_dim,), dtype=jnp.float32)

    token_ids = jax.random.randint(k_ids, (B, S), 0, vocab_size, dtype=jnp.int32)
    token_ids = token_ids.at[0, -1].set(padding_idx)   # exercise the padding row

    out = embeddings_forward(token_ids, table, gamma, beta, scale_factor=scale_factor)
    out = jax.block_until_ready(out)

    ref = _reference(token_ids, table, gamma, beta, scale_factor)
    assert out.shape == (B, S, embedding_dim)
    assert jnp.allclose(out, ref, atol=1e-4, rtol=1e-4), "mismatch vs reference"

    print("KERNEL_OK")
</pallas_src>

<mosaic_0001>
module attributes {stable_mosaic.version = 11 : i64} {
  func.func @_embeddings_kernel(%arg0: i32, %arg1: memref<64xi32, #tpu.memory_space<smem>>, %arg2: memref<128x32xf32, #tpu.memory_space<vmem>>, %arg3: memref<1x32xf32, #tpu.memory_space<vmem>>, %arg4: memref<1x32xf32, #tpu.memory_space<vmem>>, %arg5: memref<8x128xf32, #tpu.memory_space<vmem>>, %arg6: memref<32x32xf32, #tpu.memory_space<vmem>>) attributes {dimension_semantics = [#tpu.dimension_semantics<parallel>], iteration_bounds = array<i64: 2>, scalar_prefetch = 1 : i64, scratch_operands = 1 : i64, tpu.core_type = #tpu.core_type<tc>, window_params = [{pipeline_mode = #tpu.pipeline_mode<synchronous>, transform_indices = @transform_0, window_bounds = array<i64: 128, 32>}, {pipeline_mode = #tpu.pipeline_mode<synchronous>, transform_indices = @transform_1, window_bounds = array<i64: 1, 32>}, {pipeline_mode = #tpu.pipeline_mode<synchronous>, transform_indices = @transform_2, window_bounds = array<i64: 1, 32>}, {transform_indices = @transform_3, window_bounds = array<i64: 8, 128>}]} {
    %c32_i32 = arith.constant 32 : i32
    %0 = arith.muli %arg0, %c32_i32 : i32
    %c0_i32 = arith.constant 0 : i32
    %c32_i32_0 = arith.constant 32 : i32
    %1 = arith.addi %c0_i32, %c32_i32_0 : i32
    %c1_i32 = arith.constant 1 : i32
    scf.for %arg7 = %c0_i32 to %1 step %c1_i32  : i32 {
      %98 = arith.addi %0, %arg7 : i32
      %99 = arith.index_cast %98 : i32 to index
      %100 = memref.load %arg1[%99] : memref<64xi32, #tpu.memory_space<smem>>
      %c0_i32_35 = arith.constant 0 : i32
      %101 = arith.maxsi %100, %c0_i32_35 : i32
      %c127_i32 = arith.constant 127 : i32
      %102 = arith.minsi %101, %c127_i32 : i32
      %103 = arith.index_cast %102 : i32 to index
      %c0_36 = arith.constant 0 : index
      %104 = vector.load %arg2[%103, %c0_36] : memref<128x32xf32, #tpu.memory_space<vmem>>, vector<1x32xf32>
      %105 = arith.index_cast %arg7 : i32 to index
      %c0_37 = arith.constant 0 : index
      %106 = vector.load %arg6[%105, %c0_37] : memref<32x32xf32, #tpu.memory_space<vmem>>, vector<1x32xf32>
      tpu.vector_store %arg6[%105, %c0_37], %104 {strides = array<i32>} : memref<32x32xf32, #tpu.memory_space<vmem>>, vector<1x32xf32>,
    }
    %c32_i32_1 = arith.constant 32 : i32
    %c0 = arith.constant 0 : index
    %c0_2 = arith.constant 0 : index
    %2 = vector.load %arg3[%c0, %c0_2] : memref<1x32xf32, #tpu.memory_space<vmem>>, vector<1x32xf32>
    %c0_3 = arith.constant 0 : index
    %c0_4 = arith.constant 0 : index
    %3 = vector.load %arg4[%c0_3, %c0_4] : memref<1x32xf32, #tpu.memory_space<vmem>>, vector<1x32xf32>
    %c0_5 = arith.constant 0 : index
    %c0_6 = arith.constant 0 : index
    %4 = tpu.strided_load %arg6[%c0_5, %c0_6] {strides = array<i32: 4, 1>} : memref<32x32xf32, #tpu.memory_space<vmem>>, vector<8x32xf32>
    %cst = arith.constant dense<0.000000e+00> : vector<8xf32>
    %5 = vector.multi_reduction <add>, %4, %cst [1] : vector<8x32xf32> to vector<8xf32>
    %6 = vector.shape_cast %5 : vector<8xf32> to vector<8x1xf32>
    %cst_7 = arith.constant 3.200000e+01 : f32
    %7 = vector.broadcast %cst_7 : f32 to vector<8x1xf32>
    %8 = arith.divf %6, %7 : vector<8x1xf32>
    %9 = vector.broadcast %8 : vector<8x1xf32> to vector<8x32xf32>
    %10 = arith.subf %4, %9 : vector<8x32xf32>
    %11 = arith.mulf %10, %10 : vector<8x32xf32>
    %cst_8 = arith.constant dense<0.000000e+00> : vector<8xf32>
    %12 = vector.multi_reduction <add>, %11, %cst_8 [1] : vector<8x32xf32> to vector<8xf32>
    %13 = vector.shape_cast %12 : vector<8xf32> to vector<8x1xf32>
    %cst_9 = arith.constant 3.200000e+01 : f32
    %14 = vector.broadcast %cst_9 : f32 to vector<8x1xf32>
    %15 = arith.divf %13, %14 : vector<8x1xf32>
    %cst_10 = arith.constant 9.99999974E-6 : f32
    %16 = vector.broadcast %cst_10 : f32 to vector<8x1xf32>
    %17 = arith.addf %15, %16 : vector<8x1xf32>
    %18 = math.rsqrt %17 : vector<8x1xf32>
    %19 = vector.broadcast %18 : vector<8x1xf32> to vector<8x32xf32>
    %20 = arith.mulf %10, %19 : vector<8x32xf32>
    %21 = vector.broadcast %2 : vector<1x32xf32> to vector<8x32xf32>
    %22 = arith.mulf %20, %21 : vector<8x32xf32>
    %23 = vector.broadcast %3 : vector<1x32xf32> to vector<8x32xf32>
    %24 = arith.addf %22, %23 : vector<8x32xf32>
    %cst_11 = arith.constant 0.000000e+00 : f32
    %25 = vector.broadcast %cst_11 : f32 to vector<8x32xf32>
    %26 = arith.maximumf %24, %25 : vector<8x32xf32>
    %c1 = arith.constant 1 : index
    %c0_12 = arith.constant 0 : index
    %27 = tpu.strided_load %arg6[%c1, %c0_12] {strides = array<i32: 4, 1>} : memref<32x32xf32, #tpu.memory_space<vmem>>, vector<8x32xf32>
    %cst_13 = arith.constant dense<0.000000e+00> : vector<8xf32>
    %28 = vector.multi_reduction <add>, %27, %cst_13 [1] : vector<8x32xf32> to vector<8xf32>
    %29 = vector.shape_cast %28 : vector<8xf32> to vector<8x1xf32>
    %cst_14 = arith.constant 3.200000e+01 : f32
    %30 = vector.broadcast %cst_14 : f32 to vector<8x1xf32>
    %31 = arith.divf %29, %30 : vector<8x1xf32>
    %32 = vector.broadcast %31 : vector<8x1xf32> to vector<8x32xf32>
    %33 = arith.subf %27, %32 : vector<8x32xf32>
    %34 = arith.mulf %33, %33 : vector<8x32xf32>
    %cst_15 = arith.constant dense<0.000000e+00> : vector<8xf32>
    %35 = vector.multi_reduction <add>, %34, %cst_15 [1] : vector<8x32xf32> to vector<8xf32>
    %36 = vector.shape_cast %35 : vector<8xf32> to vector<8x1xf32>
    %cst_16 = arith.constant 3.200000e+01 : f32
    %37 = vector.broadcast %cst_16 : f32 to vector<8x1xf32>
    %38 = arith.divf %36, %37 : vector<8x1xf32>
    %cst_17 = arith.constant 9.99999974E-6 : f32
    %39 = vector.broadcast %cst_17 : f32 to vector<8x1xf32>
    %40 = arith.addf %38, %39 : vector<8x1xf32>
    %41 = math.rsqrt %40 : vector<8x1xf32>
    %42 = vector.broadcast %41 : vector<8x1xf32> to vector<8x32xf32>
    %43 = arith.mulf %33, %42 : vector<8x32xf32>
    %44 = vector.broadcast %2 : vector<1x32xf32> to vector<8x32xf32>
    %45 = arith.mulf %43, %44 : vector<8x32xf32>
    %46 = vector.broadcast %3 : vector<1x32xf32> to vector<8x32xf32>
    %47 = arith.addf %45, %46 : vector<8x32xf32>
    %cst_18 = arith.constant 0.000000e+00 : f32
    %48 = vector.broadcast %cst_18 : f32 to vector<8x32xf32>
    %49 = arith.maximumf %47, %48 : vector<8x32xf32>
    %c2 = arith.constant 2 : index
    %c0_19 = arith.constant 0 : index
    %50 = tpu.strided_load %arg6[%c2, %c0_19] {strides = array<i32: 4, 1>} : memref<32x32xf32, #tpu.memory_space<vmem>>, vector<8x32xf32>
    %cst_20 = arith.constant dense<0.000000e+00> : vector<8xf32>
    %51 = vector.multi_reduction <add>, %50, %cst_20 [1] : vector<8x32xf32> to vector<8xf32>
    %52 = vector.shape_cast %51 : vector<8xf32> to vector<8x1xf32>
    %cst_21 = arith.constant 3.200000e+01 : f32
    %53 = vector.broadcast %cst_21 : f32 to vector<8x1xf32>
    %54 = arith.divf %52, %53 : vector<8x1xf32>
    %55 = vector.broadcast %54 : vector<8x1xf32> to vector<8x32xf32>
    %56 = arith.subf %50, %55 : vector<8x32xf32>
    %57 = arith.mulf %56, %56 : vector<8x32xf32>
    %cst_22 = arith.constant dense<0.000000e+00> : vector<8xf32>
    %58 = vector.multi_reduction <add>, %57, %cst_22 [1] : vector<8x32xf32> to vector<8xf32>
    %59 = vector.shape_cast %58 : vector<8xf32> to vector<8x1xf32>
    %cst_23 = arith.constant 3.200000e+01 : f32
    %60 = vector.broadcast %cst_23 : f32 to vector<8x1xf32>
    %61 = arith.divf %59, %60 : vector<8x1xf32>
    %cst_24 = arith.constant 9.99999974E-6 : f32
    %62 = vector.broadcast %cst_24 : f32 to vector<8x1xf32>
    %63 = arith.addf %61, %62 : vector<8x1xf32>
    %64 = math.rsqrt %63 : vector<8x1xf32>
    %65 = vector.broadcast %64 : vector<8x1xf32> to vector<8x32xf32>
    %66 = arith.mulf %56, %65 : vector<8x32xf32>
    %67 = vector.broadcast %2 : vector<1x32xf32> to vector<8x32xf32>
    %68 = arith.mulf %66, %67 : vector<8x32xf32>
    %69 = vector.broadcast %3 : vector<1x32xf32> to vector<8x32xf32>
    %70 = arith.addf %68, %69 : vector<8x32xf32>
    %cst_25 = arith.constant 0.000000e+00 : f32
    %71 = vector.broadcast %cst_25 : f32 to vector<8x32xf32>
    %72 = arith.maximumf %70, %71 : vector<8x32xf32>
    %c3 = arith.constant 3 : index
    %c0_26 = arith.constant 0 : index
    %73 = tpu.strided_load %arg6[%c3, %c0_26] {strides = array<i32: 4, 1>} : memref<32x32xf32, #tpu.memory_space<vmem>>, vector<8x32xf32>
    %cst_27 = arith.constant dense<0.000000e+00> : vector<8xf32>
    %74 = vector.multi_reduction <add>, %73, %cst_27 [1] : vector<8x32xf32> to vector<8xf32>
    %75 = vector.shape_cast %74 : vector<8xf32> to vector<8x1xf32>
    %cst_28 = arith.constant 3.200000e+01 : f32
    %76 = vector.broadcast %cst_28 : f32 to vector<8x1xf32>
    %77 = arith.divf %75, %76 : vector<8x1xf32>
    %78 = vector.broadcast %77 : vector<8x1xf32> to vector<8x32xf32>
    %79 = arith.subf %73, %78 : vector<8x32xf32>
    %80 = arith.mulf %79, %79 : vector<8x32xf32>
    %cst_29 = arith.constant dense<0.000000e+00> : vector<8xf32>
    %81 = vector.multi_reduction <add>, %80, %cst_29 [1] : vector<8x32xf32> to vector<8xf32>
    %82 = vector.shape_cast %81 : vector<8xf32> to vector<8x1xf32>
    %cst_30 = arith.constant 3.200000e+01 : f32
    %83 = vector.broadcast %cst_30 : f32 to vector<8x1xf32>
    %84 = arith.divf %82, %83 : vector<8x1xf32>
    %cst_31 = arith.constant 9.99999974E-6 : f32
    %85 = vector.broadcast %cst_31 : f32 to vector<8x1xf32>
    %86 = arith.addf %84, %85 : vector<8x1xf32>
    %87 = math.rsqrt %86 : vector<8x1xf32>
    %88 = vector.broadcast %87 : vector<8x1xf32> to vector<8x32xf32>
    %89 = arith.mulf %79, %88 : vector<8x32xf32>
    %90 = vector.broadcast %2 : vector<1x32xf32> to vector<8x32xf32>
    %91 = arith.mulf %89, %90 : vector<8x32xf32>
    %92 = vector.broadcast %3 : vector<1x32xf32> to vector<8x32xf32>
    %93 = arith.addf %91, %92 : vector<8x32xf32>
    %cst_32 = arith.constant 0.000000e+00 : f32
    %94 = vector.broadcast %cst_32 : f32 to vector<8x32xf32>
    %95 = arith.maximumf %93, %94 : vector<8x32xf32>
    %96 = tpu.concatenate %26, %49, %72, %95 in 1 : vector<8x32xf32>, vector<8x32xf32>, vector<8x32xf32>, vector<8x32xf32> -> vector<8x128xf32>
    %c0_33 = arith.constant 0 : index
    %c0_34 = arith.constant 0 : index
    %97 = vector.load %arg5[%c0_33, %c0_34] : memref<8x128xf32, #tpu.memory_space<vmem>>, vector<8x128xf32>
    tpu.vector_store %arg5[%c0_33, %c0_34], %96 {strides = array<i32>} : memref<8x128xf32, #tpu.memory_space<vmem>>, vector<8x128xf32>,
    return
  }
  func.func @transform_0(%arg0: i32, %arg1: memref<64xi32, #tpu.memory_space<smem>>) -> (i32, i32) {
    %c0_i32 = arith.constant 0 : i32
    %c0_i32_0 = arith.constant 0 : i32
    %c0_i32_1 = arith.constant 0 : i32
    return %c0_i32, %c0_i32_0 : i32, i32
  }
  func.func @transform_1(%arg0: i32, %arg1: memref<64xi32, #tpu.memory_space<smem>>) -> (i32, i32) {
    %c0_i32 = arith.constant 0 : i32
    %c0_i32_0 = arith.constant 0 : i32
    %c0_i32_1 = arith.constant 0 : i32
    return %c0_i32, %c0_i32_0 : i32, i32
  }
  func.func @transform_2(%arg0: i32, %arg1: memref<64xi32, #tpu.memory_space<smem>>) -> (i32, i32) {
    %c0_i32 = arith.constant 0 : i32
    %c0_i32_0 = arith.constant 0 : i32
    %c0_i32_1 = arith.constant 0 : i32
    return %c0_i32, %c0_i32_0 : i32, i32
  }
  func.func @transform_3(%arg0: i32, %arg1: memref<64xi32, #tpu.memory_space<smem>>) -> (i32, i32) {
    %c0_i32 = arith.constant 0 : i32
    %c0_i32_0 = arith.constant 0 : i32
    return %arg0, %c0_i32 : i32, i32
  }
}

</mosaic_0001>

<llo_original>
// kernel: tpu_custom_call.1
$region0: #{tpu_custom_call.1}
  #allocation0 [shape = 'u32[]', space=smem, size = 0x4, offset = 0x4, fixed_abs, tag = 'smem constant byte address 0x4 - core index']
  #allocation1 [shape = 'u32[144,128]{1,0:T(1,128)}', space=vmem, size = 0x12000, scoped, tag = 'internal scratch']
  #allocation2 [shape = 'f32[32,32]{1,0:T(8,128)}', space=vmem, size = 0x4000, scoped, tag = 'scratch operand']
  #allocation3 [shape = 's32[1]{0}', space=sflag, size = 0x4, scoped, tag = 'scoped memory for tpu_custom_call.1']
  #allocation4 [shape = 'u8[512]{0}', space=smem, size = 0x200, scoped, tag = 'prefetched SMEM operand 0']
  %s0 = inlined_call_operand.vmem [shape: s32[64], index: 0, kind: input, shape index: {}]
  %s1 = inlined_call_operand.vmem [shape: f32[128,32], index: 1, kind: input, shape index: {}]
  %s2 = inlined_call_operand.vmem [shape: f32[1,32], index: 2, kind: input, shape index: {}]
  %s3 = inlined_call_operand.vmem [shape: f32[1,32], index: 3, kind: input, shape index: {}]
  %s4 = inlined_call_operand.hbm [shape: f32[16,128], index: 4, kind: output, shape index: {}]
  %s5 = sld [smem:[#allocation0]]
  $region52: #{tpu_custom_call.1} parent=0
    _
  %s7 = ssub.s32 1, %s5
  %s8 = scalar_select 0, %s7, %s5
  %s9 = sshll.u32 %s0, 4
  %s10 = int_to_ptr.vmem [resolvable:$true] %s9
  %12 = dma.vmem_to_smem %s10, 16, [#allocation4], [#allocation3]
  %13 = dma.done [#allocation3], 16
  %14 = sfence
  $region1: #{tpu_custom_call.1} parent=0
    #allocation5 [shape = 'u8[8192]{0}', space=vmem, size = 0x2000, scoped, tag = 'output window, operand 0']
    #allocation6 [shape = 's32[2]{0}', space=sflag, size = 0x8, scoped, tag = 'scoped memory for tpu_custom_call.1']
    %15 = vsyncpa [#allocation6], 0
    %s16 = scalar_lea.sflag [#allocation6], 1
    %17 = vsyncpa %s16, 0
    loop: start=0, step=1, limit=4
    $region2: #{tpu_custom_call.1} parent=1 // loop_pre_header
      _
    $region3: #{tpu_custom_call.1} parent=1 // loop_header
      %s19 = sphi 0, %s23
      %p20 = scmp.ge.s32.totalorder %s19, 4
      %s27 = sphi 0, %s27
      %s29 = sphi 0, %s27
      %s30 = sphi 0, %s29
      %s44 = sphi 0, %s30
      %s48 = sphi 0, %s48
      %s50 = sphi 0, %s48
      %s51 = sphi 0, %s50
      %s65 = sphi 0, %s51
      %s69 = sphi 0, %s69
      %s71 = sphi 0, %s69
      %s72 = sphi 0, %s71
      %s86 = sphi 0, %s72
      %s92 = sphi 0, %s94
      %s95 = sphi 0, %s92
      %s96 = sphi 0, %s95
      %s112 = sphi 0, %s96
    $region4: #{tpu_custom_call.1} parent=1 // loop_header_branch
      %22 = sbr.rel (%p20) target = $region8
    $region5: #{tpu_custom_call.1} parent=1 // loop_body
      %s24 = ssub.s32 %s19, 1
      %s25 = ssub.s32 %s19, 2
      %s26 = sadd.s32 %s19, 1
      %s28 = sadd.s32 %s27, 1
      %p31 = scmp.eq.s32.totalorder %s19, 1
      %p32 = scmp.ne.s32.totalorder %s27, %s29
      %p33 = scmp.eq.s32.totalorder %s19, 0
      %p34 = por %p32, %p33
      %p35 = scmp.ne.s32.totalorder %s27, %s29
      %p36 = scmp.eq.s32.totalorder %s24, 1
      %p37 = por %p35, %p36
      %p38 = scmp.ne.s32.totalorder %s29, %s30
      %p39 = scmp.eq.s32.totalorder %s24, 0
      %p40 = por %p38, %p39
      %p41 = scmp.ne.s32.totalorder %s29, %s30
      %p42 = scmp.eq.s32.totalorder %s25, 1
      %p43 = por %p41, %p42
      %p45 = scmp.ne.s32.totalorder %s30, %s44
      %p46 = scmp.eq.s32.totalorder %s25, 0
      %p47 = por %p45, %p46
      %s49 = sadd.s32 %s48, 1
      %p52 = scmp.eq.s32.totalorder %s19, 1
      %p53 = scmp.ne.s32.totalorder %s48, %s50
      %p54 = scmp.eq.s32.totalorder %s19, 0
      %p55 = por %p53, %p54
      %p56 = scmp.ne.s32.totalorder %s48, %s50
      %p57 = scmp.eq.s32.totalorder %s24, 1
      %p58 = por %p56, %p57
      %p59 = scmp.ne.s32.totalorder %s50, %s51
      %p60 = scmp.eq.s32.totalorder %s24, 0
      %p61 = por %p59, %p60
      %p62 = scmp.ne.s32.totalorder %s50, %s51
      %p63 = scmp.eq.s32.totalorder %s25, 1
      %p64 = por %p62, %p63
      %p66 = scmp.ne.s32.totalorder %s51, %s65
      %p67 = scmp.eq.s32.totalorder %s25, 0
      %p68 = por %p66, %p67
      %s70 = sadd.s32 %s69, 1
      %p73 = scmp.eq.s32.totalorder %s19, 1
      %p74 = scmp.ne.s32.totalorder %s69, %s71
      %p75 = scmp.eq.s32.totalorder %s19, 0
      %p76 = por %p74, %p75
      %p77 = scmp.ne.s32.totalorder %s69, %s71
      %p78 = scmp.eq.s32.totalorder %s24, 1
      %p79 = por %p77, %p78
      %p80 = scmp.ne.s32.totalorder %s71, %s72
      %p81 = scmp.eq.s32.totalorder %s24, 0
      %p82 = por %p80, %p81
      %p83 = scmp.ne.s32.totalorder %s71, %s72
      %p84 = scmp.eq.s32.totalorder %s25, 1
      %p85 = por %p83, %p84
      %p87 = scmp.ne.s32.totalorder %s72, %s86
      %p88 = scmp.eq.s32.totalorder %s25, 0
      %p89 = por %p87, %p88
      %s90 = ssub.s32 %s19, %s26
      %p91 = scmp.eq.s32.totalorder %s90, 0
      %s93 = sadd.s32 %s92, 1
      %s94 = scalar_select %p91, %s92, %s93
      %p97 = pneg %p91
      %p98 = scmp.eq.s32.totalorder %s19, 1
      %p99 = por %p97, %p98
      %p100 = scmp.ne.s32.totalorder %s92, %s95
      %p101 = scmp.eq.s32.totalorder %s19, 0
      %p102 = por %p100, %p101
      %p103 = scmp.ne.s32.totalorder %s92, %s95
      %p104 = scmp.eq.s32.totalorder %s24, 1
      %p105 = por %p103, %p104
      %p106 = scmp.ne.s32.totalorder %s95, %s96
      %p107 = scmp.eq.s32.totalorder %s24, 0
      %p108 = por %p106, %p107
      %p109 = scmp.ne.s32.totalorder %s95, %s96
      %p110 = scmp.eq.s32.totalorder %s25, 1
      %p111 = por %p109, %p110
      %p113 = scmp.ne.s32.totalorder %s96, %s112
      %p114 = scmp.eq.s32.totalorder %s25, 0
      %p115 = por %p113, %p114
      %p116 = scmp.le.s32.totalorder 1, %s19
      %p117 = scmp.lt.s32.totalorder %s19, 3
      %p118 = pnand %p116, %p117
      %p119 = pneg %p118
      // Predicated region
      $region9: #{tpu_custom_call.1} parent=5 // pred_check
        _
      $region10: #{tpu_custom_call.1} parent=5 // pred_check_branch
        %121 = sbr.rel (%p118) target = $region12
      $region11: #{tpu_custom_call.1} parent=5 // pred_region
        %s122 = ssub.s32 %s19, 1
        // Predicated region
        $region13: #{tpu_custom_call.1} parent=11 // pred_check
          %p123 = pneg %p40
        $region14: #{tpu_custom_call.1} parent=11 // pred_check_branch
          %125 = sbr.rel (%p123) target = $region16
        $region15: #{tpu_custom_call.1} parent=11 // pred_region
          _
        $region16: #{tpu_custom_call.1} parent=11 // pred_fallthru
          _
        // Predicated region
        $region17: #{tpu_custom_call.1} parent=11 // pred_check
          %p126 = pneg %p61
        $region18: #{tpu_custom_call.1} parent=11 // pred_check_branch
          %128 = sbr.rel (%p126) target = $region20
        $region19: #{tpu_custom_call.1} parent=11 // pred_region
          _
        $region20: #{tpu_custom_call.1} parent=11 // pred_fallthru
          _
        // Predicated region
        $region21: #{tpu_custom_call.1} parent=11 // pred_check
          %p129 = pneg %p82
        $region22: #{tpu_custom_call.1} parent=11 // pred_check_branch
          %131 = sbr.rel (%p129) target = $region24
        $region23: #{tpu_custom_call.1} parent=11 // pred_region
          _
        $region24: #{tpu_custom_call.1} parent=11 // pred_fallthru
          _
      $region12: #{tpu_custom_call.1} parent=5 // pred_fallthru
        _
      %p132 = scmp.lt.s32.totalorder %s19, 2
      // Predicated region
      $region25: #{tpu_custom_call.1} parent=5 // pred_check
        %p133 = pneg %p132
      $region26: #{tpu_custom_call.1} parent=5 // pred_check_branch
        %135 = sbr.rel (%p133) target = $region28
      $region27: #{tpu_custom_call.1} parent=5 // pred_region
        _
      $region28: #{tpu_custom_call.1} parent=5 // pred_fallthru
        _
      %p136 = scmp.le.s32.totalorder 1, %s19
      %p137 = scmp.lt.s32.totalorder %s19, 3
      %p138 = pnand %p136, %p137
      %p139 = pneg %p138
      // Predicated region
      $region29: #{tpu_custom_call.1} parent=5 // pred_check
        _
      $region30: #{tpu_custom_call.1} parent=5 // pred_check_branch
        %141 = sbr.rel (%p138) target = $region32
      $region31: #{tpu_custom_call.1} parent=5 // pred_region
        %s142 = ssub.s32 %s19, 1
        %p143 = pneg %p40
        %p144 = pneg %p37
        %p145 = pneg %p61
        %p146 = pneg %p58
        %p147 = pneg %p82
        %p148 = pneg %p79
        %p149 = pneg %p108
        %p150 = pneg %p105
        %s151 = sand.u32 %s95, 1
        %s152 = scalar_lea.sflag [#allocation6], %s151
        %s153 = sand.u32 %s95, 1
        %s154 = smul.addr %s153, 8
        %s155 = scalar_lea.vmem [#allocation5], %s154
        %s156 = smul.u32 %s24, 32
        loop: start=0, step=1, limit=32
        $region33: #{tpu_custom_call.1} parent=31 // loop_pre_header
          _
        $region34: #{tpu_custom_call.1} parent=31 // loop_header
          %s158 = sphi 0, %s162
          %p159 = scmp.ge.s32.totalorder %s158, 32
        $region35: #{tpu_custom_call.1} parent=31 // loop_header_branch
          %161 = sbr.rel (%p159) target = $region39
        $region36: #{tpu_custom_call.1} parent=31 // loop_body
          %s163 = sadd.s32 %s156, %s158
          %s164 = sld [smem:[#allocation4 + %s163]]
          %p165 = scmp.gt.s32.totalorder %s164, 0
          %s166 = scalar_select %p165, %s164, 0
          %p167 = scmp.lt.s32.totalorder %s166, 127
          %s168 = scalar_select %p167, %s166, 127
          %s169 = scalar_lea.vmem %s1, %s168
          %v170 = vld [vmem:[%s169] sm:$0x1]
          %s171 = scalar_lea.vmem [#allocation2], %s158
          %vm172 = vcmask 253952
          %173 = vst.msk [vmem:[%s171] sm:$0x1] %vm172, %v170
        $region37: #{tpu_custom_call.1} parent=31 // loop_footer
          %s162 = sadd.s32 1, %s158
        $region38: #{tpu_custom_call.1} parent=31 // loop_footer_branch
          %157 = sbr.rel target = $region34
        $region39: #{tpu_custom_call.1} parent=31 // loop_exit
          _
        %v174 = vld [vmem:[%s2] sm:$0x1]
        %v175 = vld [vmem:[%s3] sm:$0x1]
        %v176 = vld [vmem:[#allocation2] ss:$4 sm:$0xff]
        %vm177 = vcmask 261120
        %v178 = vsel %vm177, %v176, 0.0
        %179 = vadd.xlane.f32.xlu0 %v178
        %v180 = vpop.xlane.xlu0 %179
        %v181 = vrcp.pop 32.0
        %v182 = vmul.f32 %v180, %v181
        %v183 = vsub.f32 %v176, %v182
        %v184 = vmul.f32 %v183, %v183
        %v185 = vsel %vm177, %v184, 0.0
        %186 = vadd.xlane.f32.xlu0 %v185
        %v187 = vpop.xlane.xlu0 %186
        %v188 = vmul.f32 %v187, %v181
        %v189 = vadd.f32 %v188, 1e-05
        %v190 = vrsqrt.pop %v189
        %v191 = vmul.f32 %v183, %v190
        %v193 = vlaneseq
        %v194 = vshrl.u32 %v193, 7
        %v195 = vsub.s32 0, %v194
        %v196 = vrot.slane %v174, %v195
        %v198 = vmul.f32 %v191, %v196
        %v200 = vlaneseq
        %v201 = vshrl.u32 %v200, 7
        %v202 = vsub.s32 0, %v201
        %v203 = vrot.slane %v175, %v202
        %v205 = vadd.f32 %v198, %v203
        %v206 = vmax.f32 %v205, 0.0
        %s207 = scalar_lea.vmem [#allocation2], 1
        %v208 = vld [vmem:[%s207] ss:$4 sm:$0xff]
        %v209 = vsel %vm177, %v208, 0.0
        %210 = vadd.xlane.f32.xlu0 %v209
        %v211 = vpop.xlane.xlu0 %210
        %v212 = vmul.f32 %v211, %v181
        %v213 = vsub.f32 %v208, %v212
        %v214 = vmul.f32 %v213, %v213
        %v215 = vsel %vm177, %v214, 0.0
        %216 = vadd.xlane.f32.xlu0 %v215
        %v217 = vpop.xlane.xlu0 %216
        %v218 = vmul.f32 %v217, %v181
        %v219 = vadd.f32 %v218, 1e-05
        %v220 = vrsqrt.pop %v219
        %v221 = vmul.f32 %v213, %v220
        %v222 = vmul.f32 %v221, %v196
        %v223 = vadd.f32 %v222, %v203
        %v224 = vmax.f32 %v223, 0.0
        %s225 = scalar_lea.vmem [#allocation2], 2
        %v226 = vld [vmem:[%s225] ss:$4 sm:$0xff]
        %v227 = vsel %vm177, %v226, 0.0
        %228 = vadd.xlane.f32.xlu0 %v227
        %v229 = vpop.xlane.xlu0 %228
        %v230 = vmul.f32 %v229, %v181
        %v231 = vsub.f32 %v226, %v230
        %v232 = vmul.f32 %v231, %v231
        %v233 = vsel %vm177, %v232, 0.0
        %234 = vadd.xlane.f32.xlu0 %v233
        %v235 = vpop.xlane.xlu0 %234
        %v236 = vmul.f32 %v235, %v181
        %v237 = vadd.f32 %v236, 1e-05
        %v238 = vrsqrt.pop %v237
        %v239 = vmul.f32 %v231, %v238
        %v240 = vmul.f32 %v239, %v196
        %v241 = vadd.f32 %v240, %v203
        %v242 = vmax.f32 %v241, 0.0
        %s243 = scalar_lea.vmem [#allocation2], 3
        %v244 = vld [vmem:[%s243] ss:$4 sm:$0xff]
        %v245 = vsel %vm177, %v244, 0.0
        %246 = vadd.xlane.f32.xlu0 %v245
        %v247 = vpop.xlane.xlu0 %246
        %v248 = vmul.f32 %v247, %v181
        %v249 = vsub.f32 %v244, %v248
        %v250 = vmul.f32 %v249, %v249
        %v251 = vsel %vm177, %v250, 0.0
        %252 = vadd.xlane.f32.xlu0 %v251
        %v253 = vpop.xlane.xlu0 %252
        %v254 = vmul.f32 %v253, %v181
        %v255 = vadd.f32 %v254, 1e-05
        %v256 = vrsqrt.pop %v255
        %v257 = vmul.f32 %v249, %v256
        %v258 = vmul.f32 %v257, %v196
        %v259 = vadd.f32 %v258, %v203
        %v260 = vmax.f32 %v259, 0.0
        %262 = vrot.lane.b32.xlu0 %v224, 32
        %v263 = vpop.permute.xlu0 %262
        %266 = vrot.lane.b32.xlu0 %v242, 64
        %v267 = vpop.permute.xlu0 %266
        %270 = vrot.lane.b32.xlu0 %v260, 96
        %v271 = vpop.permute.xlu0 %270
        %v273 = vsel %vm177, %v206, %v263
        %vm274 = vcmask 523264
        %v275 = vsel %vm274, %v273, %v267
        %vm276 = vcmask 785408
        %v277 = vsel %vm276, %v275, %v271
        %278 = vst [vmem:[%s155] sm:$0xff] %v277
        %s279 = sand.u32 %s95, 1
        %s280 = scalar_lea.sflag [#allocation6], %s279
        %s281 = sand.u32 %s95, 1
        %s282 = smul.addr %s281, 8
        %s283 = scalar_lea.vmem [#allocation5], %s282
        // Predicated region
        $region40: #{tpu_custom_call.1} parent=31 // pred_check
          %p284 = pneg %p105
        $region41: #{tpu_custom_call.1} parent=31 // pred_check_branch
          %286 = sbr.rel (%p284) target = $region43
        $region42: #{tpu_custom_call.1} parent=31 // pred_region
          %s288 = ssub.s32 128, 128
          %289 = vsyncadd %s280, %s288
          %s290 = smul.addr %s24, 128
          %s291 = scalar_lea.hbm %s4, %s290
          %s293 = sshll.u32 %s283, 4
          %s294 = int_to_ptr.vmem [resolvable:$true] %s293
          %296 = dma.vmem_to_hbm [thread:$0]  %s294, 128, %s291, %s280
        $region43: #{tpu_custom_call.1} parent=31 // pred_fallthru
          _
      $region32: #{tpu_custom_call.1} parent=5 // pred_fallthru
        _
      %p297 = scmp.le.s32.totalorder 2, %s19
      // Predicated region
      $region44: #{tpu_custom_call.1} parent=5 // pred_check
        %p298 = pneg %p297
      $region45: #{tpu_custom_call.1} parent=5 // pred_check_branch
        %300 = sbr.rel (%p298) target = $region47
      $region46: #{tpu_custom_call.1} parent=5 // pred_region
        %s301 = ssub.s32 %s19, 2
        // Predicated region
        $region48: #{tpu_custom_call.1} parent=46 // pred_check
          %p302 = pneg %p111
        $region49: #{tpu_custom_call.1} parent=46 // pred_check_branch
          %304 = sbr.rel (%p302) target = $region51
        $region50: #{tpu_custom_call.1} parent=46 // pred_region
          %s305 = sand.u32 %s96, 1
          %s306 = scalar_lea.sflag [#allocation6], %s305
          %s307 = sand.u32 %s96, 1
          %s308 = smul.addr %s307, 8
          %s309 = scalar_lea.vmem [#allocation5], %s308
          %310 = dma.done %s306, 128
        $region51: #{tpu_custom_call.1} parent=46 // pred_fallthru
          _
      $region47: #{tpu_custom_call.1} parent=5 // pred_fallthru
        _
    $region6: #{tpu_custom_call.1} parent=1 // loop_footer
      %s23 = sadd.s32 1, %s19
    $region7: #{tpu_custom_call.1} parent=1 // loop_footer_branch
      %18 = sbr.rel target = $region3
    $region8: #{tpu_custom_call.1} parent=1 // loop_exit
      _
    %311 = vsyncpa [#allocation6], 1
    %s312 = scalar_lea.sflag [#allocation6], 1
    %313 = vsyncpa %s312, 1

</llo_original>
